<compile_context>
chip_gen: v5e
topology: v5e:2x2
jax: 0.10.0
libtpu: 0.0.40
codegen_flags: <defaults>
</compile_context>

<pallas_src>
import numpy as np
import jax
import jax.numpy as jnp
from jax import lax
from jax.experimental import pallas as pl
from jax.experimental.pallas import tpu as pltpu


def _ceil_to(x, m):
    return ((x + m - 1) // m) * m


def _cdiv(a, b):
    return -(-a // b)


def _vmem_budgets():
    """Per-generation VMEM budgeting (v7x: 64 MiB/TC, v5e/v6e: 128 MiB)."""
    try:
        vmem_cap = int(pltpu.get_tpu_info().vmem_capacity_bytes)
    except Exception:
        vmem_cap = 64 * 1024 * 1024                 # conservative fallback (v7x)
    if vmem_cap >= 100 * 1024 * 1024:               # v5e / v6e: 128 MiB physical
        per_buf = 16 * 1024 * 1024                  # big tiles amortize step overhead
        acc_budget = 8 * 1024 * 1024
        limit_cap = 96 * 1024 * 1024
    else:                                           # v7x: 64 MiB per TensorCore
        per_buf = 8 * 1024 * 1024                   # depth-2 pipeline, ~8 MiB buffers
        acc_budget = 6 * 1024 * 1024
        limit_cap = 48 * 1024 * 1024
    return per_buf, acc_budget, limit_cap


def _choose_tiles(N, C, HW, elem_bytes, per_buf_bytes, acc_budget_bytes,
                  max_block_hw=None):
    # block_n: multiple of 8, capped so the f32 (block_n, C, 128) accumulator fits
    # its budget; aim for >= 2 N tiles so the "parallel" axis shards across both
    # TensorCores on v7x (free on single-TC chips since block_hw grows to match).
    bn_cap = max(8, (acc_budget_bytes // (C * 128 * 4)) // 8 * 8)
    if N <= 8:
        block_n = N                                  # single tile == full dim (legal)
    else:
        block_n = min(128, _ceil_to(_cdiv(N, 2), 8), bn_cap)
    num_n_tiles = _cdiv(N, block_n)

    # block_hw: whole spatial row if it fits one pipeline buffer (regime A);
    # otherwise the largest multiple of 128 within the per-buffer budget (regime B,
    # streamed, ragged tail masked in-kernel -- no host-side padding of x and no
    # requirement that block_hw divides HW).
    hw_cap = per_buf_bytes // max(1, block_n * C * elem_bytes)
    if max_block_hw is not None:
        hw_cap = min(hw_cap, max_block_hw)
    if HW <= 128 or HW <= hw_cap:
        block_hw = HW
        num_hw_tiles = 1
    else:
        block_hw = max(128, (hw_cap // 128) * 128)
        num_hw_tiles = _cdiv(HW, block_hw)
    return block_n, num_n_tiles, block_hw, num_hw_tiles


def _make_navigation_kernel(HW, block_hw, num_hw_tiles):
    n_body_slices = block_hw // 128
    rem = HW - (num_hw_tiles - 1) * block_hw         # valid columns in the last tile
    n_tail_full = rem // 128
    tail_width = rem % 128

    def _tile_partial(x_ref, n_full, tail_w):
        # Tree-sum the in-bounds 128-lane groups of this x tile (pure VPU, f32).
        slabs = [x_ref[..., j * 128:(j + 1) * 128].astype(jnp.float32)
                 for j in range(n_full)]
        if tail_w:
            j = n_full
            t = x_ref[..., j * 128:(j + 1) * 128].astype(jnp.float32)
            lane = lax.broadcasted_iota(jnp.int32, t.shape, t.ndim - 1)
            slabs.append(jnp.where(lane < tail_w, t, 0.0))   # mask OOB spatial lanes
        while len(slabs) > 1:
            nxt = [slabs[i] + slabs[i + 1] for i in range(0, len(slabs) - 1, 2)]
            if len(slabs) % 2:
                nxt.append(slabs[-1])
            slabs = nxt
        return slabs[0]

    def _epilogue(pooled, shift_ref, wpool_ref, wgs_ref, bgs_ref, mask_ref):
        # conv_pool (1x1, no bias) with BN scale and 1/HW folded into the (2, C)
        # weight; done as two VPU broadcast-mul + lane-reduces (no MXU needed).
        w = wpool_ref[...]                                             # (2, C)
        g0 = jnp.sum(pooled * w[0:1, :], axis=-1, keepdims=True) + shift_ref[0]
        g1 = jnp.sum(pooled * w[1:2, :], axis=-1, keepdims=True) + shift_ref[1]
        g0 = jnp.maximum(g0, 0.0)                                      # BN shift+ReLU
        g1 = jnp.maximum(g1, 0.0)
        wgs = wgs_ref[...]                                             # (block_n, 4)
        bgs = bgs_ref[...]                                             # (block_n, 2)
        l0 = wgs[:, 0:1] * g0 + wgs[:, 1:2] * g1 + bgs[:, 0:1]         # logit ch 0
        l1 = wgs[:, 2:3] * g0 + wgs[:, 3:4] * g1 + bgs[:, 1:2]         # logit ch 1
        # Hard Gumbel-Softmax (eval / force_hard, no noise): argmax one-hot, keep
        # channel 1; ties -> index 0.  Lane-dense 128-wide unmasked store; the
        # wrapper keeps column 0 (rows beyond N are dropped by Pallas).
        mask_ref[...] = jnp.broadcast_to(
            (l1 > l0).astype(mask_ref.dtype), mask_ref.shape)

    def kernel(x_ref, wpool_ref, shift_ref, wgs_ref, bgs_ref, mask_ref, *acc):
        if num_hw_tiles == 1:
            # Whole spatial row in one tile: direct pooled sum, no accumulator.
            pooled = jnp.sum(x_ref[...].astype(jnp.float32), axis=-1)
            _epilogue(pooled, shift_ref, wpool_ref, wgs_ref, bgs_ref, mask_ref)
            return

        acc_ref = acc[0]
        k = pl.program_id(1)

        @pl.when(k == 0)
        def _init():
            acc_ref[...] = jnp.zeros_like(acc_ref)

        @pl.when(k < num_hw_tiles - 1)
        def _body():
            acc_ref[...] = acc_ref[...] + _tile_partial(x_ref, n_body_slices, 0)

        @pl.when(k == num_hw_tiles - 1)
        def _tail():
            acc_f = acc_ref[...] + _tile_partial(x_ref, n_tail_full, tail_width)
            pooled = jnp.sum(acc_f, axis=-1)          # single cross-lane reduce
            _epilogue(pooled, shift_ref, wpool_ref, wgs_ref, bgs_ref, mask_ref)

    return kernel


def init_params(key, inplanes, num_segments):
    # Module-faithful initialization (conv_gs bias [1, 10, 1, 10, ...]).
    k1, k2, k3, k4 = jax.random.split(key, 4)
    S = num_segments
    return {
        "conv_pool_w": jax.random.normal(k1, (2, inplanes, 1, 1), jnp.float32) * 0.1,
        "bn_gamma": jnp.abs(jax.random.normal(k2, (2,), jnp.float32)) + 0.5,
        "bn_beta": jax.random.normal(k3, (2,), jnp.float32) * 0.1,
        "bn_mean": jnp.zeros((2,), jnp.float32),
        "bn_var": jnp.ones((2,), jnp.float32),
        "conv_gs_w": jax.random.normal(k4, (2 * S, 2, 1, 1), jnp.float32) * 0.1,
        "conv_gs_b": jnp.where(jnp.arange(2 * S) % 2 == 0, 1.0, 10.0).astype(jnp.float32),
    }


def _test_params(key, inplanes, num_segments):
    # Same structure, richer random values so the hard mask actually depends on the
    # pooled activations (the real init's [1, 10] bias makes every gate 1).
    S = num_segments
    ks = jax.random.split(key, 7)
    return {
        "conv_pool_w": jax.random.normal(ks[0], (2, inplanes, 1, 1), jnp.float32),
        "bn_gamma": 1.0 + jnp.abs(jax.random.normal(ks[1], (2,), jnp.float32)),
        "bn_beta": jax.random.normal(ks[2], (2,), jnp.float32) * 0.5,
        "bn_mean": jax.random.normal(ks[3], (2,), jnp.float32) * 0.1,
        "bn_var": 0.5 + jnp.abs(jax.random.normal(ks[4], (2,), jnp.float32)),
        "conv_gs_w": jax.random.normal(ks[5], (2 * S, 2, 1, 1), jnp.float32),
        "conv_gs_b": jax.random.normal(ks[6], (2 * S,), jnp.float32) * 0.5,
    }


def navigation_forward(x, params, num_segments=8, temperature=1.0, _max_block_hw=None):
    # TODO(synk): temperature only rescales the soft softmax and the training-time
    # Gumbel noise path is stochastic; only the deterministic eval / force_hard
    # (argmax one-hot) path is implemented here.
    N, C, H, W = x.shape
    S = num_segments
    assert N % S == 0
    HW = H * W

    per_buf, acc_budget, limit_cap = _vmem_budgets()
    elem_bytes = jnp.dtype(x.dtype).itemsize
    block_n, num_n_tiles, block_hw, num_hw_tiles = _choose_tiles(
        N, C, HW, elem_bytes, per_buf, acc_budget, _max_block_hw)

    # Stream x in its native dtype; no host-side padding or casting (reshape of a
    # contiguous array is free).  Ragged N / HW edges are masked in-kernel.
    x3 = x.reshape(N, C, HW)

    # conv_pool weight as (2, C) with eval-mode BN scale and the 1/HW pooling factor
    # folded in; BN shift kept separate (ReLU prevents folding it further).
    eps = 1e-5
    scale = params["bn_gamma"] / jnp.sqrt(params["bn_var"] + eps)              # (2,)
    shift = (params["bn_beta"] - params["bn_mean"] * scale).astype(jnp.float32)  # (2,)
    wpool_fused = (params["conv_pool_w"].reshape(2, C)
                   * scale[:, None] / float(HW)).astype(jnp.float32)           # (2, C)

    # conv_gs (grouped 1x1) == per-frame 2x2 affine; frame n uses group n % S.
    wgs = params["conv_gs_w"].reshape(S, 2, 2).reshape(S, 4)
    bgs = params["conv_gs_b"].reshape(S, 2)
    g_idx = jnp.arange(N) % S
    wgs_flat = wgs[g_idx].astype(jnp.float32)                                  # (N, 4)
    bgs_flat = bgs[g_idx].astype(jnp.float32)                                  # (N, 2)

    kernel = _make_navigation_kernel(HW, block_hw, num_hw_tiles)
    scratch = ([pltpu.VMEM((block_n, C, 128), jnp.float32)]
               if num_hw_tiles > 1 else [])

    grid_spec = pltpu.PrefetchScalarGridSpec(
        num_scalar_prefetch=0,
        grid=(num_n_tiles, num_hw_tiles),
        in_specs=[
            pl.BlockSpec((block_n, C, block_hw), lambda i, k: (i, 0, k)),   # x
            pl.BlockSpec((2, C), lambda i, k: (0, 0)),                      # fused wpool
            pl.BlockSpec(memory_space=pltpu.MemorySpace.SMEM),              # BN shift
            pl.BlockSpec((block_n, 4), lambda i, k: (i, 0)),                # conv_gs W
            pl.BlockSpec((block_n, 2), lambda i, k: (i, 0)),                # conv_gs b
        ],
        out_specs=pl.BlockSpec((block_n, 128), lambda i, k: (i, 0)),
        scratch_shapes=scratch,
    )

    # vmem_limit derived from the actual buffer sum (x double-buffer + accumulator +
    # small tiles), capped per generation well below physical VMEM.
    x_tile_bytes = block_n * C * block_hw * elem_bytes
    acc_bytes = block_n * C * 128 * 4 if num_hw_tiles > 1 else 0
    est = 2 * x_tile_bytes + acc_bytes + 4 * block_n * 128 * 4 + (1 << 20)
    vmem_limit = int(min(limit_cap, max(32 * 1024 * 1024, est * 3 // 2)))

    mask2d = pl.pallas_call(
        kernel,
        out_shape=jax.ShapeDtypeStruct((N, 128), jnp.float32),
        grid_spec=grid_spec,
        compiler_params=pltpu.CompilerParams(
            # N tiles are independent (sharded across TensorCores on multi-TC chips);
            # the HW reduction is serial and stays last.
            dimension_semantics=("parallel", "arbitrary"),
            vmem_limit_bytes=vmem_limit,
        ),
    )(x3, wpool_fused, shift, wgs_flat, bgs_flat)

    return mask2d[:, 0].reshape(N, 1, 1, 1)


def navigation_ref(x, params, num_segments=8):
    # Pure-JAX reference mirroring the PyTorch forward (eval-mode BN, hard gumbel).
    N, C, H, W = x.shape
    S = num_segments
    avg = x.astype(jnp.float32).mean(axis=(2, 3))             # pool -> (N, C)
    g = avg @ params["conv_pool_w"].reshape(2, C).T           # conv_pool
    eps = 1e-5
    g = (g - params["bn_mean"]) / jnp.sqrt(params["bn_var"] + eps) \
        * params["bn_gamma"] + params["bn_beta"]              # bn
    g = jnp.maximum(g, 0.0)                                   # relu
    batch = N // S
    gflat = g.reshape(batch, S, 2)
    w = params["conv_gs_w"].reshape(S, 2, 2)
    b = params["conv_gs_b"].reshape(S, 2)
    logits = jnp.einsum("bsi,sji->bsj", gflat, w) + b[None]   # conv_gs (grouped 1x1)
    soft = jax.nn.softmax(logits, axis=-1)
    hard = (jnp.argmax(soft, axis=-1) == 1).astype(jnp.float32)  # gs hard, channel 1
    return hard.reshape(N, 1, 1, 1)


if __name__ == "__main__":
    key = jax.random.PRNGKey(0)
    k1, k2, k3, k4 = jax.random.split(key, 4)

    # --- Test 1: module-faithful init, whole spatial row per tile (regime A). ---
    inplanes, S, batch, H, W = 16, 8, 2, 8, 8
    N = batch * S
    x = jax.random.normal(k1, (N, inplanes, H, W), jnp.float32)
    params = init_params(k2, inplanes, S)
    out = jax.block_until_ready(navigation_forward(x, params, num_segments=S))
    ref = jax.block_until_ready(navigation_ref(x, params, num_segments=S))
    assert out.shape == (N, 1, 1, 1)
    np.testing.assert_allclose(np.asarray(out), np.asarray(ref), atol=0.0)

    # --- Test 2: randomized params on the same shape (regime A, x-dependent mask). --
    params_t = _test_params(k3, inplanes, S)
    out = jax.block_until_ready(navigation_forward(x, params_t, num_segments=S))
    ref = jax.block_until_ready(navigation_ref(x, params_t, num_segments=S))
    np.testing.assert_allclose(np.asarray(out), np.asarray(ref), atol=0.0)

    # --- Test 3: ragged N and ragged HW, forced streaming reduction (regime B). ----
    S2, batch2, H2, W2 = 4, 3, 20, 20
    N2 = batch2 * S2                      # 12: not a multiple of 8 -> ragged N tile
    x2 = jax.random.normal(k4, (N2, inplanes, H2, W2), jnp.float32)
    params2 = _test_params(k3, inplanes, S2)
    out2 = jax.block_until_ready(
        navigation_forward(x2, params2, num_segments=S2, _max_block_hw=128))
    ref2 = jax.block_until_ready(navigation_ref(x2, params2, num_segments=S2))
    np.testing.assert_allclose(np.asarray(out2), np.asarray(ref2), atol=0.0)

    print("KERNEL_OK")
</pallas_src>

<mosaic_0001>
module attributes {stable_mosaic.version = 11 : i64} {
  func.func @kernel(%arg0: i32, %arg1: i32, %arg2: memref<8x16x64xf32, #tpu.memory_space<vmem>>, %arg3: memref<2x16xf32, #tpu.memory_space<vmem>>, %arg4: memref<2xf32, #tpu.memory_space<smem>>, %arg5: memref<8x4xf32, #tpu.memory_space<vmem>>, %arg6: memref<8x2xf32, #tpu.memory_space<vmem>>, %arg7: memref<8x128xf32, #tpu.memory_space<vmem>>) attributes {dimension_semantics = [#tpu.dimension_semantics<parallel>, #tpu.dimension_semantics<arbitrary>], iteration_bounds = array<i64: 2, 1>, scalar_prefetch = 0 : i64, scratch_operands = 0 : i64, tpu.core_type = #tpu.core_type<tc>, window_params = [{transform_indices = @transform_0, window_bounds = array<i64: 8, 16, 64>}, {pipeline_mode = #tpu.pipeline_mode<synchronous>, transform_indices = @transform_1, window_bounds = array<i64: 2, 16>}, {transform_indices = @transform_2, window_bounds = array<i64: 2>}, {transform_indices = @transform_3, window_bounds = array<i64: 8, 4>}, {transform_indices = @transform_4, window_bounds = array<i64: 8, 2>}, {transform_indices = @transform_5, window_bounds = array<i64: 8, 128>}]} {
    %c0 = arith.constant 0 : index
    %c0_0 = arith.constant 0 : index
    %c0_1 = arith.constant 0 : index
    %0 = vector.load %arg2[%c0, %c0_0, %c0_1] : memref<8x16x64xf32, #tpu.memory_space<vmem>>, vector<8x16x64xf32>
    %cst = arith.constant dense<0.000000e+00> : vector<8x16xf32>
    %1 = vector.multi_reduction <add>, %0, %cst [2] : vector<8x16x64xf32> to vector<8x16xf32>
    %c0_2 = arith.constant 0 : index
    %c0_3 = arith.constant 0 : index
    %2 = vector.load %arg3[%c0_2, %c0_3] : memref<2x16xf32, #tpu.memory_space<vmem>>, vector<2x16xf32>
    %3 = vector.extract_strided_slice %2 {offsets = [0, 0], sizes = [1, 16], strides = [1, 1]} : vector<2x16xf32> to vector<1x16xf32>
    %4 = vector.broadcast %3 : vector<1x16xf32> to vector<8x16xf32>
    %5 = arith.mulf %1, %4 : vector<8x16xf32>
    %cst_4 = arith.constant dense<0.000000e+00> : vector<8xf32>
    %6 = vector.multi_reduction <add>, %5, %cst_4 [1] : vector<8x16xf32> to vector<8xf32>
    %7 = vector.shape_cast %6 : vector<8xf32> to vector<8x1xf32>
    %c0_5 = arith.constant 0 : index
    %8 = memref.load %arg4[%c0_5] : memref<2xf32, #tpu.memory_space<smem>>
    %9 = vector.broadcast %8 : f32 to vector<8x1xf32>
    %10 = arith.addf %7, %9 : vector<8x1xf32>
    %11 = vector.extract_strided_slice %2 {offsets = [1, 0], sizes = [1, 16], strides = [1, 1]} : vector<2x16xf32> to vector<1x16xf32>
    %12 = vector.broadcast %11 : vector<1x16xf32> to vector<8x16xf32>
    %13 = arith.mulf %1, %12 : vector<8x16xf32>
    %cst_6 = arith.constant dense<0.000000e+00> : vector<8xf32>
    %14 = vector.multi_reduction <add>, %13, %cst_6 [1] : vector<8x16xf32> to vector<8xf32>
    %15 = vector.shape_cast %14 : vector<8xf32> to vector<8x1xf32>
    %c1 = arith.constant 1 : index
    %16 = memref.load %arg4[%c1] : memref<2xf32, #tpu.memory_space<smem>>
    %17 = vector.broadcast %16 : f32 to vector<8x1xf32>
    %18 = arith.addf %15, %17 : vector<8x1xf32>
    %cst_7 = arith.constant 0.000000e+00 : f32
    %19 = vector.broadcast %cst_7 : f32 to vector<8x1xf32>
    %20 = arith.maximumf %10, %19 : vector<8x1xf32>
    %cst_8 = arith.constant 0.000000e+00 : f32
    %21 = vector.broadcast %cst_8 : f32 to vector<8x1xf32>
    %22 = arith.maximumf %18, %21 : vector<8x1xf32>
    %c0_9 = arith.constant 0 : index
    %c0_10 = arith.constant 0 : index
    %23 = vector.load %arg5[%c0_9, %c0_10] : memref<8x4xf32, #tpu.memory_space<vmem>>, vector<8x4xf32>
    %c0_11 = arith.constant 0 : index
    %c0_12 = arith.constant 0 : index
    %24 = vector.load %arg6[%c0_11, %c0_12] : memref<8x2xf32, #tpu.memory_space<vmem>>, vector<8x2xf32>
    %25 = vector.extract_strided_slice %23 {offsets = [0, 0], sizes = [8, 1], strides = [1, 1]} : vector<8x4xf32> to vector<8x1xf32>
    %26 = arith.mulf %25, %20 : vector<8x1xf32>
    %27 = vector.extract_strided_slice %23 {offsets = [0, 1], sizes = [8, 1], strides = [1, 1]} : vector<8x4xf32> to vector<8x1xf32>
    %28 = arith.mulf %27, %22 : vector<8x1xf32>
    %29 = arith.addf %26, %28 : vector<8x1xf32>
    %30 = vector.extract_strided_slice %24 {offsets = [0, 0], sizes = [8, 1], strides = [1, 1]} : vector<8x2xf32> to vector<8x1xf32>
    %31 = arith.addf %29, %30 : vector<8x1xf32>
    %32 = vector.extract_strided_slice %23 {offsets = [0, 2], sizes = [8, 1], strides = [1, 1]} : vector<8x4xf32> to vector<8x1xf32>
    %33 = arith.mulf %32, %20 : vector<8x1xf32>
    %34 = vector.extract_strided_slice %23 {offsets = [0, 3], sizes = [8, 1], strides = [1, 1]} : vector<8x4xf32> to vector<8x1xf32>
    %35 = arith.mulf %34, %22 : vector<8x1xf32>
    %36 = arith.addf %33, %35 : vector<8x1xf32>
    %37 = vector.extract_strided_slice %24 {offsets = [0, 1], sizes = [8, 1], strides = [1, 1]} : vector<8x2xf32> to vector<8x1xf32>
    %38 = arith.addf %36, %37 : vector<8x1xf32>
    %39 = arith.cmpf ogt, %38, %31 : vector<8x1xf32>
    %40 = arith.extui %39 : vector<8x1xi1> to vector<8x1xi32>
    %41 = arith.sitofp %40 : vector<8x1xi32> to vector<8x1xf32>
    %42 = vector.shape_cast %41 : vector<8x1xf32> to vector<8x1xf32>
    %43 = vector.broadcast %42 : vector<8x1xf32> to vector<8x128xf32>
    %c0_13 = arith.constant 0 : index
    %c0_14 = arith.constant 0 : index
    %44 = vector.load %arg7[%c0_13, %c0_14] : memref<8x128xf32, #tpu.memory_space<vmem>>, vector<8x128xf32>
    tpu.vector_store %arg7[%c0_13, %c0_14], %43 {strides = array<i32>} : memref<8x128xf32, #tpu.memory_space<vmem>>, vector<8x128xf32>,
    return
  }
  func.func @transform_0(%arg0: i32, %arg1: i32) -> (i32, i32, i32) {
    %c0_i32 = arith.constant 0 : i32
    %c0_i32_0 = arith.constant 0 : i32
    return %arg0, %c0_i32, %arg1 : i32, i32, i32
  }
  func.func @transform_1(%arg0: i32, %arg1: i32) -> (i32, i32) {
    %c0_i32 = arith.constant 0 : i32
    %c0_i32_0 = arith.constant 0 : i32
    %c0_i32_1 = arith.constant 0 : i32
    return %c0_i32, %c0_i32_0 : i32, i32
  }
  func.func @transform_2(%arg0: i32, %arg1: i32) -> i32 {
    %c0_i32 = arith.constant 0 : i32
    %c0_i32_0 = arith.constant 0 : i32
    return %c0_i32 : i32
  }
  func.func @transform_3(%arg0: i32, %arg1: i32) -> (i32, i32) {
    %c0_i32 = arith.constant 0 : i32
    %c0_i32_0 = arith.constant 0 : i32
    return %arg0, %c0_i32 : i32, i32
  }
  func.func @transform_4(%arg0: i32, %arg1: i32) -> (i32, i32) {
    %c0_i32 = arith.constant 0 : i32
    %c0_i32_0 = arith.constant 0 : i32
    return %arg0, %c0_i32 : i32, i32
  }
  func.func @transform_5(%arg0: i32, %arg1: i32) -> (i32, i32) {
    %c0_i32 = arith.constant 0 : i32
    %c0_i32_0 = arith.constant 0 : i32
    return %arg0, %c0_i32 : i32, i32
  }
}

</mosaic_0001>

<llo_original>
// kernel: tpu_custom_call.1
$region0: #{tpu_custom_call.1}
  #allocation0 [shape = 'u32[]', space=smem, size = 0x4, offset = 0x4, fixed_abs, tag = 'smem constant byte address 0x4 - core index']
  #allocation1 [shape = 'u32[72,128]{1,0:T(1,128)}', space=vmem, size = 0x9000, scoped, tag = 'internal scratch']
  %s0 = inlined_call_operand.hbm [shape: f32[16,16,64], index: 0, kind: input, shape index: {}]
  %s1 = inlined_call_operand.vmem [shape: f32[2,16], index: 1, kind: input, shape index: {}]
  %s2 = inlined_call_operand.vmem [shape: f32[2], index: 2, kind: input, shape index: {}]
  %s3 = inlined_call_operand.vmem [shape: f32[16,4], index: 3, kind: input, shape index: {}]
  %s4 = inlined_call_operand.vmem [shape: f32[16,2], index: 4, kind: input, shape index: {}]
  %s5 = inlined_call_operand.hbm [shape: f32[16,128], index: 5, kind: output, shape index: {}]
  %s6 = sld [smem:[#allocation0]]
  $region61: #{tpu_custom_call.1} parent=0
    _
  %s8 = ssub.s32 1, %s6
  %s9 = scalar_select 0, %s8, %s6
  $region1: #{tpu_custom_call.1} parent=0
    #allocation2 [shape = 'u8[131072]{0}', space=vmem, size = 0x20000, scoped, tag = 'input window, operand 0']
    #allocation3 [shape = 's32[2]{0}', space=sflag, size = 0x8, scoped, tag = 'scoped memory for tpu_custom_call.1']
    #allocation4 [shape = 's32[2]{0}', space=sflag, size = 0x8, scoped, tag = 'scoped memory for tpu_custom_call.1']
    #allocation5 [shape = 's32[2]{0}', space=sflag, size = 0x8, scoped, tag = 'scoped memory for tpu_custom_call.1']
    #allocation6 [shape = 'u8[512]{0}', space=smem, size = 0x200, scoped, tag = 'input window, operand 2, single buffered']
    #allocation7 [shape = 'u8[8192]{0}', space=vmem, size = 0x2000, scoped, tag = 'output window, operand 0']
    %10 = vsyncpa [#allocation3], 0
    %s11 = scalar_lea.sflag [#allocation3], 1
    %12 = vsyncpa %s11, 0
    %13 = vsyncpa [#allocation5], 0
    %14 = vsyncpa [#allocation4], 0
    %s15 = scalar_lea.sflag [#allocation4], 1
    %16 = vsyncpa %s15, 0
    loop: start=0, step=1, limit=4
    $region2: #{tpu_custom_call.1} parent=1 // loop_pre_header
      _
    $region3: #{tpu_custom_call.1} parent=1 // loop_header
      %s18 = sphi 0, %s22
      %p19 = scmp.ge.s32.totalorder %s18, 4
      %s25 = sphi 0, %s37
      %s26 = sphi 0, %s33
      %s27 = sphi 0, %s25
      %s28 = sphi 0, %s26
      %s29 = sphi 0, %s27
      %s30 = sphi 0, %s28
      %s42 = sphi 0, %s44
      %s45 = sphi 0, %s42
      %s46 = sphi 0, %s45
      %s62 = sphi 0, %s46
      %s66 = sphi 0, %s66
      %s68 = sphi 0, %s66
      %s69 = sphi 0, %s68
      %s83 = sphi 0, %s69
      %s87 = sphi 0, %s87
      %s89 = sphi 0, %s87
      %s90 = sphi 0, %s89
      %s104 = sphi 0, %s90
      %s110 = sphi 0, %s112
      %s113 = sphi 0, %s110
      %s114 = sphi 0, %s113
      %s130 = sphi 0, %s114
      %s136 = sphi 0, %s138
      %s139 = sphi 0, %s136
      %s140 = sphi 0, %s139
      %s156 = sphi 0, %s140
      %s162 = sphi 0, %s164
      %s165 = sphi 0, %s162
      %s166 = sphi 0, %s165
      %s182 = sphi 0, %s166
    $region4: #{tpu_custom_call.1} parent=1 // loop_header_branch
      %21 = sbr.rel (%p19) target = $region8
    $region5: #{tpu_custom_call.1} parent=1 // loop_body
      %s23 = ssub.s32 %s18, 1
      %s24 = ssub.s32 %s18, 2
      %s31 = sadd.s32 1, %s26
      %p32 = scmp.ge.s32.totalorder %s31, 1
      %s33 = scalar_select %p32, 0, %s31
      %s34 = sadd.s32 1, %s25
      %s35 = scalar_select %p32, %s34, %s25
      %p36 = scmp.ge.s32.totalorder %s35, 2
      %s37 = scalar_select %p36, 0, %s35
      %s38 = ssub.s32 %s25, %s37
      %s39 = ssub.s32 %s26, %s33
      %s40 = sor.u32 %s38, %s39
      %p41 = scmp.eq.s32.totalorder %s40, 0
      %s43 = sadd.s32 %s42, 1
      %s44 = scalar_select %p41, %s42, %s43
      %p47 = pneg %p41
      %p48 = scmp.eq.s32.totalorder %s18, 1
      %p49 = por %p47, %p48
      %p50 = scmp.ne.s32.totalorder %s42, %s45
      %p51 = scmp.eq.s32.totalorder %s18, 0
      %p52 = por %p50, %p51
      %p53 = scmp.ne.s32.totalorder %s42, %s45
      %p54 = scmp.eq.s32.totalorder %s23, 1
      %p55 = por %p53, %p54
      %p56 = scmp.ne.s32.totalorder %s45, %s46
      %p57 = scmp.eq.s32.totalorder %s23, 0
      %p58 = por %p56, %p57
      %p59 = scmp.ne.s32.totalorder %s45, %s46
      %p60 = scmp.eq.s32.totalorder %s24, 1
      %p61 = por %p59, %p60
      %p63 = scmp.ne.s32.totalorder %s46, %s62
      %p64 = scmp.eq.s32.totalorder %s24, 0
      %p65 = por %p63, %p64
      %s67 = sadd.s32 %s66, 1
      %p70 = scmp.eq.s32.totalorder %s18, 1
      %p71 = scmp.ne.s32.totalorder %s66, %s68
      %p72 = scmp.eq.s32.totalorder %s18, 0
      %p73 = por %p71, %p72
      %p74 = scmp.ne.s32.totalorder %s66, %s68
      %p75 = scmp.eq.s32.totalorder %s23, 1
      %p76 = por %p74, %p75
      %p77 = scmp.ne.s32.totalorder %s68, %s69
      %p78 = scmp.eq.s32.totalorder %s23, 0
      %p79 = por %p77, %p78
      %p80 = scmp.ne.s32.totalorder %s68, %s69
      %p81 = scmp.eq.s32.totalorder %s24, 1
      %p82 = por %p80, %p81
      %p84 = scmp.ne.s32.totalorder %s69, %s83
      %p85 = scmp.eq.s32.totalorder %s24, 0
      %p86 = por %p84, %p85
      %s88 = sadd.s32 %s87, 1
      %p91 = scmp.eq.s32.totalorder %s18, 1
      %p92 = scmp.ne.s32.totalorder %s87, %s89
      %p93 = scmp.eq.s32.totalorder %s18, 0
      %p94 = por %p92, %p93
      %p95 = scmp.ne.s32.totalorder %s87, %s89
      %p96 = scmp.eq.s32.totalorder %s23, 1
      %p97 = por %p95, %p96
      %p98 = scmp.ne.s32.totalorder %s89, %s90
      %p99 = scmp.eq.s32.totalorder %s23, 0
      %p100 = por %p98, %p99
      %p101 = scmp.ne.s32.totalorder %s89, %s90
      %p102 = scmp.eq.s32.totalorder %s24, 1
      %p103 = por %p101, %p102
      %p105 = scmp.ne.s32.totalorder %s90, %s104
      %p106 = scmp.eq.s32.totalorder %s24, 0
      %p107 = por %p105, %p106
      %s108 = ssub.s32 %s25, %s37
      %p109 = scmp.eq.s32.totalorder %s108, 0
      %s111 = sadd.s32 %s110, 1
      %s112 = scalar_select %p109, %s110, %s111
      %p115 = pneg %p109
      %p116 = scmp.eq.s32.totalorder %s18, 1
      %p117 = por %p115, %p116
      %p118 = scmp.ne.s32.totalorder %s110, %s113
      %p119 = scmp.eq.s32.totalorder %s18, 0
      %p120 = por %p118, %p119
      %p121 = scmp.ne.s32.totalorder %s110, %s113
      %p122 = scmp.eq.s32.totalorder %s23, 1
      %p123 = por %p121, %p122
      %p124 = scmp.ne.s32.totalorder %s113, %s114
      %p125 = scmp.eq.s32.totalorder %s23, 0
      %p126 = por %p124, %p125
      %p127 = scmp.ne.s32.totalorder %s113, %s114
      %p128 = scmp.eq.s32.totalorder %s24, 1
      %p129 = por %p127, %p128
      %p131 = scmp.ne.s32.totalorder %s114, %s130
      %p132 = scmp.eq.s32.totalorder %s24, 0
      %p133 = por %p131, %p132
      %s134 = ssub.s32 %s25, %s37
      %p135 = scmp.eq.s32.totalorder %s134, 0
      %s137 = sadd.s32 %s136, 1
      %s138 = scalar_select %p135, %s136, %s137
      %p141 = pneg %p135
      %p142 = scmp.eq.s32.totalorder %s18, 1
      %p143 = por %p141, %p142
      %p144 = scmp.ne.s32.totalorder %s136, %s139
      %p145 = scmp.eq.s32.totalorder %s18, 0
      %p146 = por %p144, %p145
      %p147 = scmp.ne.s32.totalorder %s136, %s139
      %p148 = scmp.eq.s32.totalorder %s23, 1
      %p149 = por %p147, %p148
      %p150 = scmp.ne.s32.totalorder %s139, %s140
      %p151 = scmp.eq.s32.totalorder %s23, 0
      %p152 = por %p150, %p151
      %p153 = scmp.ne.s32.totalorder %s139, %s140
      %p154 = scmp.eq.s32.totalorder %s24, 1
      %p155 = por %p153, %p154
      %p157 = scmp.ne.s32.totalorder %s140, %s156
      %p158 = scmp.eq.s32.totalorder %s24, 0
      %p159 = por %p157, %p158
      %s160 = ssub.s32 %s25, %s37
      %p161 = scmp.eq.s32.totalorder %s160, 0
      %s163 = sadd.s32 %s162, 1
      %s164 = scalar_select %p161, %s162, %s163
      %p167 = pneg %p161
      %p168 = scmp.eq.s32.totalorder %s18, 1
      %p169 = por %p167, %p168
      %p170 = scmp.ne.s32.totalorder %s162, %s165
      %p171 = scmp.eq.s32.totalorder %s18, 0
      %p172 = por %p170, %p171
      %p173 = scmp.ne.s32.totalorder %s162, %s165
      %p174 = scmp.eq.s32.totalorder %s23, 1
      %p175 = por %p173, %p174
      %p176 = scmp.ne.s32.totalorder %s165, %s166
      %p177 = scmp.eq.s32.totalorder %s23, 0
      %p178 = por %p176, %p177
      %p179 = scmp.ne.s32.totalorder %s165, %s166
      %p180 = scmp.eq.s32.totalorder %s24, 1
      %p181 = por %p179, %p180
      %p183 = scmp.ne.s32.totalorder %s166, %s182
      %p184 = scmp.eq.s32.totalorder %s24, 0
      %p185 = por %p183, %p184
      %p186 = scmp.le.s32.totalorder 1, %s18
      %p187 = scmp.lt.s32.totalorder %s18, 3
      %p188 = pnand %p186, %p187
      %p189 = pneg %p188
      // Predicated region
      $region9: #{tpu_custom_call.1} parent=5 // pred_check
        _
      $region10: #{tpu_custom_call.1} parent=5 // pred_check_branch
        %191 = sbr.rel (%p188) target = $region12
      $region11: #{tpu_custom_call.1} parent=5 // pred_region
        %s192 = ssub.s32 %s18, 1
        // Predicated region
        $region13: #{tpu_custom_call.1} parent=11 // pred_check
          %p193 = pneg %p79
        $region14: #{tpu_custom_call.1} parent=11 // pred_check_branch
          %195 = sbr.rel (%p193) target = $region16
        $region15: #{tpu_custom_call.1} parent=11 // pred_region
          _
        $region16: #{tpu_custom_call.1} parent=11 // pred_fallthru
          _
        // Predicated region
        $region17: #{tpu_custom_call.1} parent=11 // pred_check
          %p196 = pneg %p100
        $region18: #{tpu_custom_call.1} parent=11 // pred_check_branch
          %198 = sbr.rel (%p196) target = $region20
        $region19: #{tpu_custom_call.1} parent=11 // pred_region
          %200 = vsyncadd [#allocation5], 0
          %s202 = sshll.u32 %s2, 4
          %s203 = int_to_ptr.vmem [resolvable:$true] %s202
          %205 = dma.vmem_to_smem %s203, 16, [#allocation6], [#allocation5]
        $region20: #{tpu_custom_call.1} parent=11 // pred_fallthru
          _
      $region12: #{tpu_custom_call.1} parent=5 // pred_fallthru
        _
      %p206 = scmp.lt.s32.totalorder %s18, 2
      // Predicated region
      $region21: #{tpu_custom_call.1} parent=5 // pred_check
        %p207 = pneg %p206
      $region22: #{tpu_custom_call.1} parent=5 // pred_check_branch
        %209 = sbr.rel (%p207) target = $region24
      $region23: #{tpu_custom_call.1} parent=5 // pred_region
        // Predicated region
        $region25: #{tpu_custom_call.1} parent=23 // pred_check
          %p210 = pneg %p52
        $region26: #{tpu_custom_call.1} parent=23 // pred_check_branch
          %212 = sbr.rel (%p210) target = $region28
        $region27: #{tpu_custom_call.1} parent=23 // pred_region
          %s213 = sand.u32 %s42, 1
          %s214 = scalar_lea.sflag [#allocation3], %s213
          %s215 = sand.u32 %s42, 1
          %s216 = smul.addr %s215, 128
          %s217 = scalar_lea.vmem [#allocation2], %s216
          %s218 = smul.u32 8, %s25
          %220 = vsyncadd %s214, 0
          %s221 = smul.addr %s218, 2
          %s222 = sadd.s32 %s26, %s221
          %s223 = smul.addr %s222, 8
          %s224 = scalar_lea.hbm %s0, %s223
          %s225 = sshll.u32 %s224, 4
          %s226 = int_to_ptr.hbm [resolvable:$true] %s225
          %s227 = sshll.u32 %s217, 4
          %s228 = int_to_ptr.vmem [resolvable:$true] %s227
          %233 = dma.hbm_to_vmem [thread:$0]  %s226, 2048, %s228, %s214, 128, 128, 8
        $region28: #{tpu_custom_call.1} parent=23 // pred_fallthru
          _
        // Predicated region
        $region29: #{tpu_custom_call.1} parent=23 // pred_check
          %p234 = pneg %p120
        $region30: #{tpu_custom_call.1} parent=23 // pred_check_branch
          %236 = sbr.rel (%p234) target = $region32
        $region31: #{tpu_custom_call.1} parent=23 // pred_region
          %p237 = scmp.lt.s32.totalorder %s25, 1
          %s238 = scalar_select %p237, %s25, 1
          %s239 = smul.addr %s238, 8
          %s240 = scalar_lea.vmem %s3, %s239
        $region32: #{tpu_custom_call.1} parent=23 // pred_fallthru
          _
        // Predicated region
        $region33: #{tpu_custom_call.1} parent=23 // pred_check
          %p241 = pneg %p146
        $region34: #{tpu_custom_call.1} parent=23 // pred_check_branch
          %243 = sbr.rel (%p241) target = $region36
        $region35: #{tpu_custom_call.1} parent=23 // pred_region
          %p244 = scmp.lt.s32.totalorder %s25, 1
          %s245 = scalar_select %p244, %s25, 1
          %s246 = smul.addr %s245, 8
          %s247 = scalar_lea.vmem %s4, %s246
        $region36: #{tpu_custom_call.1} parent=23 // pred_fallthru
          _
      $region24: #{tpu_custom_call.1} parent=5 // pred_fallthru
        _
      %p248 = scmp.le.s32.totalorder 1, %s18
      %p249 = scmp.lt.s32.totalorder %s18, 3
      %p250 = pnand %p248, %p249
      %p251 = pneg %p250
      // Predicated region
      $region37: #{tpu_custom_call.1} parent=5 // pred_check
        _
      $region38: #{tpu_custom_call.1} parent=5 // pred_check_branch
        %253 = sbr.rel (%p250) target = $region40
      $region39: #{tpu_custom_call.1} parent=5 // pred_region
        %s254 = ssub.s32 %s18, 1
        %s255 = sand.u32 %s45, 1
        %s256 = scalar_lea.sflag [#allocation3], %s255
        %s257 = sand.u32 %s45, 1
        %s258 = smul.addr %s257, 128
        %s259 = scalar_lea.vmem [#allocation2], %s258
        // Predicated region
        $region41: #{tpu_custom_call.1} parent=39 // pred_check
          %p260 = pneg %p58
        $region42: #{tpu_custom_call.1} parent=39 // pred_check_branch
          %262 = sbr.rel (%p260) target = $region44
        $region43: #{tpu_custom_call.1} parent=39 // pred_region
          %264 = dma.done %s256, 2048
        $region44: #{tpu_custom_call.1} parent=39 // pred_fallthru
          _
        // Predicated region
        $region45: #{tpu_custom_call.1} parent=39 // pred_check
          %p265 = pneg %p100
        $region46: #{tpu_custom_call.1} parent=39 // pred_check_branch
          %267 = sbr.rel (%p265) target = $region48
        $region47: #{tpu_custom_call.1} parent=39 // pred_region
          %269 = dma.done [#allocation5], 16
        $region48: #{tpu_custom_call.1} parent=39 // pred_fallthru
          _
        %270 = sfence
        %s271 = sand.u32 %s45, 1
        %s272 = scalar_lea.sflag [#allocation3], %s271
        %s273 = sand.u32 %s45, 1
        %s274 = smul.addr %s273, 128
        %s275 = scalar_lea.vmem [#allocation2], %s274
        %p276 = pneg %p58
        %p277 = pneg %p55
        %p278 = pneg %p79
        %p279 = pneg %p76
        %p280 = pneg %p100
        %p281 = pneg %p97
        %p282 = scmp.lt.s32.totalorder %s27, 1
        %s283 = scalar_select %p282, %s27, 1
        %s284 = smul.addr %s283, 8
        %s285 = scalar_lea.vmem %s3, %s284
        %p286 = pneg %p126
        %p287 = pneg %p123
        %p288 = scmp.lt.s32.totalorder %s27, 1
        %s289 = scalar_select %p288, %s27, 1
        %s290 = smul.addr %s289, 8
        %s291 = scalar_lea.vmem %s4, %s290
        %p292 = pneg %p152
        %p293 = pneg %p149
        %p294 = pneg %p178
        %p295 = pneg %p175
        %s296 = sand.u32 %s165, 1
        %s297 = scalar_lea.sflag [#allocation4], %s296
        %s298 = sand.u32 %s165, 1
        %s299 = smul.addr %s298, 8
        %s300 = scalar_lea.vmem [#allocation7], %s299
        %s301 = smul.u32 8, %s27
        %p302 = scmp.lt.s32.totalorder %s27, 1
        %s303 = scalar_select %p302, %s27, 1
        %s304 = smul.addr %s303, 8
        %s305 = scalar_lea.vmem %s3, %s304
        %p306 = scmp.lt.s32.totalorder %s27, 1
        %s307 = scalar_select %p306, %s27, 1
        %s308 = smul.addr %s307, 8
        %s309 = scalar_lea.vmem %s4, %s308
        %v310 = vld [vmem:[%s259] sm:$0xff]
        %v311 = vld [vmem:[%s259 + $0x8] sm:$0xff]
        %v312 = vld [vmem:[%s259 + $0x10] sm:$0xff]
        %v313 = vld [vmem:[%s259 + $0x18] sm:$0xff]
        %v314 = vld [vmem:[%s259 + $0x20] sm:$0xff]
        %v315 = vld [vmem:[%s259 + $0x28] sm:$0xff]
        %v316 = vld [vmem:[%s259 + $0x30] sm:$0xff]
        %v317 = vld [vmem:[%s259 + $0x38] sm:$0xff]
        %v318 = vld [vmem:[%s259 + $0x40] sm:$0xff]
        %v319 = vld [vmem:[%s259 + $0x48] sm:$0xff]
        %v320 = vld [vmem:[%s259 + $0x50] sm:$0xff]
        %v321 = vld [vmem:[%s259 + $0x58] sm:$0xff]
        %v322 = vld [vmem:[%s259 + $0x60] sm:$0xff]
        %v323 = vld [vmem:[%s259 + $0x68] sm:$0xff]
        %v324 = vld [vmem:[%s259 + $0x70] sm:$0xff]
        %v325 = vld [vmem:[%s259 + $0x78] sm:$0xff]
        %vm326 = vcmask 523264
        %v327 = vsel %vm326, %v310, 0.0
        %328 = vadd.xlane.f32.xlu0 %v327
        %v329 = vpop.xlane.xlu0 %328
        %v330 = vsel %vm326, %v311, 0.0
        %331 = vadd.xlane.f32.xlu0 %v330
        %v332 = vpop.xlane.xlu0 %331
        %v333 = vsel %vm326, %v312, 0.0
        %334 = vadd.xlane.f32.xlu0 %v333
        %v335 = vpop.xlane.xlu0 %334
        %v336 = vsel %vm326, %v313, 0.0
        %337 = vadd.xlane.f32.xlu0 %v336
        %v338 = vpop.xlane.xlu0 %337
        %v339 = vsel %vm326, %v314, 0.0
        %340 = vadd.xlane.f32.xlu0 %v339
        %v341 = vpop.xlane.xlu0 %340
        %v342 = vsel %vm326, %v315, 0.0
        %343 = vadd.xlane.f32.xlu0 %v342
        %v344 = vpop.xlane.xlu0 %343
        %v345 = vsel %vm326, %v316, 0.0
        %346 = vadd.xlane.f32.xlu0 %v345
        %v347 = vpop.xlane.xlu0 %346
        %v348 = vsel %vm326, %v317, 0.0
        %349 = vadd.xlane.f32.xlu0 %v348
        %v350 = vpop.xlane.xlu0 %349
        %v351 = vsel %vm326, %v318, 0.0
        %352 = vadd.xlane.f32.xlu0 %v351
        %v353 = vpop.xlane.xlu0 %352
        %v354 = vsel %vm326, %v319, 0.0
        %355 = vadd.xlane.f32.xlu0 %v354
        %v356 = vpop.xlane.xlu0 %355
        %v357 = vsel %vm326, %v320, 0.0
        %358 = vadd.xlane.f32.xlu0 %v357
        %v359 = vpop.xlane.xlu0 %358
        %v360 = vsel %vm326, %v321, 0.0
        %361 = vadd.xlane.f32.xlu0 %v360
        %v362 = vpop.xlane.xlu0 %361
        %v363 = vsel %vm326, %v322, 0.0
        %364 = vadd.xlane.f32.xlu0 %v363
        %v365 = vpop.xlane.xlu0 %364
        %v366 = vsel %vm326, %v323, 0.0
        %367 = vadd.xlane.f32.xlu0 %v366
        %v368 = vpop.xlane.xlu0 %367
        %v369 = vsel %vm326, %v324, 0.0
        %370 = vadd.xlane.f32.xlu0 %v369
        %v371 = vpop.xlane.xlu0 %370
        %v372 = vsel %vm326, %v325, 0.0
        %373 = vadd.xlane.f32.xlu0 %v372
        %v374 = vpop.xlane.xlu0 %373
        %v375 = vld [vmem:[%s1] sm:$0x3]
        %v376 = vperm.slane %v375, 0
        %v378 = vlaneseq
        %v379 = vshrl.u32 %v378, 7
        %381 = vset.pattern.permute.xlu0 %v379
        %382 = vperm.xlu0 %381, %v376
        %v383 = vpop.permute.xlu0 %382
        %v384 = vlaneseq
        %v385 = vshrl.u32 %v384, 7
        %v386 = vadd.s32 %v385, 8
        %387 = vset.pattern.permute.xlu0 %v386
        %388 = vperm.xlu0 %387, %v376
        %v389 = vpop.permute.xlu0 %388
        %v392 = vmul.f32 %v329, %v383
        %v393 = vmul.f32 %v332, %v389
        %v394 = vmul.f32 %v335, %v383
        %v395 = vmul.f32 %v338, %v389
        %v396 = vmul.f32 %v341, %v383
        %v397 = vmul.f32 %v344, %v389
        %v398 = vmul.f32 %v347, %v383
        %v399 = vmul.f32 %v350, %v389
        %v400 = vmul.f32 %v353, %v383
        %v401 = vmul.f32 %v356, %v389
        %v402 = vmul.f32 %v359, %v383
        %v403 = vmul.f32 %v362, %v389
        %v404 = vmul.f32 %v365, %v383
        %v405 = vmul.f32 %v368, %v389
        %v406 = vmul.f32 %v371, %v383
        %v407 = vmul.f32 %v374, %v389
        %424 = vset.pattern.permute.xlu0 0
        %425 = vperm.xlu0 %424, %v392
        %v426 = vpop.permute.xlu0 %425
        %427 = vset.pattern.permute.xlu0 0
        %428 = vperm.xlu0 %427, %v393
        %v429 = vpop.permute.xlu0 %428
        %430 = vset.pattern.permute.xlu0 0
        %431 = vperm.xlu0 %430, %v394
        %v432 = vpop.permute.xlu0 %431
        %433 = vset.pattern.permute.xlu0 0
        %434 = vperm.xlu0 %433, %v395
        %v435 = vpop.permute.xlu0 %434
        %436 = vset.pattern.permute.xlu0 0
        %437 = vperm.xlu0 %436, %v396
        %v438 = vpop.permute.xlu0 %437
        %439 = vset.pattern.permute.xlu0 0
        %440 = vperm.xlu0 %439, %v397
        %v441 = vpop.permute.xlu0 %440
        %442 = vset.pattern.permute.xlu0 0
        %443 = vperm.xlu0 %442, %v398
        %v444 = vpop.permute.xlu0 %443
        %445 = vset.pattern.permute.xlu0 0
        %446 = vperm.xlu0 %445, %v399
        %v447 = vpop.permute.xlu0 %446
        %448 = vset.pattern.permute.xlu0 0
        %449 = vperm.xlu0 %448, %v400
        %v450 = vpop.permute.xlu0 %449
        %451 = vset.pattern.permute.xlu0 0
        %452 = vperm.xlu0 %451, %v401
        %v453 = vpop.permute.xlu0 %452
        %454 = vset.pattern.permute.xlu0 0
        %455 = vperm.xlu0 %454, %v402
        %v456 = vpop.permute.xlu0 %455
        %457 = vset.pattern.permute.xlu0 0
        %458 = vperm.xlu0 %457, %v403
        %v459 = vpop.permute.xlu0 %458
        %460 = vset.pattern.permute.xlu0 0
        %461 = vperm.xlu0 %460, %v404
        %v462 = vpop.permute.xlu0 %461
        %463 = vset.pattern.permute.xlu0 0
        %464 = vperm.xlu0 %463, %v405
        %v465 = vpop.permute.xlu0 %464
        %466 = vset.pattern.permute.xlu0 0
        %467 = vperm.xlu0 %466, %v406
        %v468 = vpop.permute.xlu0 %467
        %469 = vset.pattern.permute.xlu0 0
        %470 = vperm.xlu0 %469, %v407
        %v471 = vpop.permute.xlu0 %470
        %v472 = vlaneseq
        %v473 = vand.u32 %v472, 127
        %v474 = vperm.slane %v426, %v473
        %v475 = vadd.s32 %v473, 4294967288
        %v476 = vperm.slane %v429, %v475
        %vm477 = vcmask 130112
        %v478 = vsel %vm477, %v476, %v474
        %v479 = vperm.slane %v432, %v473
        %v480 = vperm.slane %v435, %v475
        %v481 = vsel %vm477, %v480, %v479
        %v482 = vperm.slane %v438, %v473
        %v483 = vperm.slane %v441, %v475
        %v484 = vsel %vm477, %v483, %v482
        %v485 = vperm.slane %v444, %v473
        %v486 = vperm.slane %v447, %v475
        %v487 = vsel %vm477, %v486, %v485
        %v488 = vperm.slane %v450, %v473
        %v489 = vperm.slane %v453, %v475
        %v490 = vsel %vm477, %v489, %v488
        %v491 = vperm.slane %v456, %v473
        %v492 = vperm.slane %v459, %v475
        %v493 = vsel %vm477, %v492, %v491
        %v494 = vperm.slane %v462, %v473
        %v495 = vperm.slane %v465, %v475
        %v496 = vsel %vm477, %v495, %v494
        %v497 = vperm.slane %v468, %v473
        %v498 = vperm.slane %v471, %v475
        %v499 = vsel %vm477, %v498, %v497
        %vm500 = vcmask 1041409
        %v501 = vsel %vm500, %v481, %v478
        %vm502 = vcmask 1042434
        %v503 = vsel %vm502, %v484, %v501
        %vm504 = vcmask 1043459
        %v505 = vsel %vm504, %v487, %v503
        %vm506 = vcmask 1044484
        %v507 = vsel %vm506, %v490, %v505
        %vm508 = vcmask 1045509
        %v509 = vsel %vm508, %v493, %v507
        %vm510 = vcmask 1046534
        %v511 = vsel %vm510, %v496, %v509
        %vm512 = vcmask 1047559
        %v513 = vsel %vm512, %v499, %v511
        %vm515 = vcmask 130048
        %v516 = vsel %vm515, %v513, 0.0
        %517 = vadd.xlane.f32.xlu0 %v516
        %v518 = vpop.xlane.xlu0 %517
        %s519 = sld [smem:[#allocation6]]
        %v520 = vstv %s519
        %v521 = vadd.f32 %v518, %v520
        %v522 = vperm.slane %v375, 1
        %v524 = vlaneseq
        %v525 = vshrl.u32 %v524, 7
        %527 = vset.pattern.permute.xlu0 %v525
        %528 = vperm.xlu0 %527, %v522
        %v529 = vpop.permute.xlu0 %528
        %v530 = vlaneseq
        %v531 = vshrl.u32 %v530, 7
        %v532 = vadd.s32 %v531, 8
        %533 = vset.pattern.permute.xlu0 %v532
        %534 = vperm.xlu0 %533, %v522
        %v535 = vpop.permute.xlu0 %534
        %v538 = vmul.f32 %v329, %v529
        %v539 = vmul.f32 %v332, %v535
        %v540 = vmul.f32 %v335, %v529
        %v541 = vmul.f32 %v338, %v535
        %v542 = vmul.f32 %v341, %v529
        %v543 = vmul.f32 %v344, %v535
        %v544 = vmul.f32 %v347, %v529
        %v545 = vmul.f32 %v350, %v535
        %v546 = vmul.f32 %v353, %v529
        %v547 = vmul.f32 %v356, %v535
        %v548 = vmul.f32 %v359, %v529
        %v549 = vmul.f32 %v362, %v535
        %v550 = vmul.f32 %v365, %v529
        %v551 = vmul.f32 %v368, %v535
        %v552 = vmul.f32 %v371, %v529
        %v553 = vmul.f32 %v374, %v535
        %570 = vset.pattern.permute.xlu0 0
        %571 = vperm.xlu0 %570, %v538
        %v572 = vpop.permute.xlu0 %571
        %573 = vset.pattern.permute.xlu0 0
        %574 = vperm.xlu0 %573, %v539
        %v575 = vpop.permute.xlu0 %574
        %576 = vset.pattern.permute.xlu0 0
        %577 = vperm.xlu0 %576, %v540
        %v578 = vpop.permute.xlu0 %577
        %579 = vset.pattern.permute.xlu0 0
        %580 = vperm.xlu0 %579, %v541
        %v581 = vpop.permute.xlu0 %580
        %582 = vset.pattern.permute.xlu0 0
        %583 = vperm.xlu0 %582, %v542
        %v584 = vpop.permute.xlu0 %583
        %585 = vset.pattern.permute.xlu0 0
        %586 = vperm.xlu0 %585, %v543
        %v587 = vpop.permute.xlu0 %586
        %588 = vset.pattern.permute.xlu0 0
        %589 = vperm.xlu0 %588, %v544
        %v590 = vpop.permute.xlu0 %589
        %591 = vset.pattern.permute.xlu0 0
        %592 = vperm.xlu0 %591, %v545
        %v593 = vpop.permute.xlu0 %592
        %594 = vset.pattern.permute.xlu0 0
        %595 = vperm.xlu0 %594, %v546
        %v596 = vpop.permute.xlu0 %595
        %597 = vset.pattern.permute.xlu0 0
        %598 = vperm.xlu0 %597, %v547
        %v599 = vpop.permute.xlu0 %598
        %600 = vset.pattern.permute.xlu0 0
        %601 = vperm.xlu0 %600, %v548
        %v602 = vpop.permute.xlu0 %601
        %603 = vset.pattern.permute.xlu0 0
        %604 = vperm.xlu0 %603, %v549
        %v605 = vpop.permute.xlu0 %604
        %606 = vset.pattern.permute.xlu0 0
        %607 = vperm.xlu0 %606, %v550
        %v608 = vpop.permute.xlu0 %607
        %609 = vset.pattern.permute.xlu0 0
        %610 = vperm.xlu0 %609, %v551
        %v611 = vpop.permute.xlu0 %610
        %612 = vset.pattern.permute.xlu0 0
        %613 = vperm.xlu0 %612, %v552
        %v614 = vpop.permute.xlu0 %613
        %615 = vset.pattern.permute.xlu0 0
        %616 = vperm.xlu0 %615, %v553
        %v617 = vpop.permute.xlu0 %616
        %v618 = vperm.slane %v572, %v473
        %v619 = vperm.slane %v575, %v475
        %v620 = vsel %vm477, %v619, %v618
        %v621 = vperm.slane %v578, %v473
        %v622 = vperm.slane %v581, %v475
        %v623 = vsel %vm477, %v622, %v621
        %v624 = vperm.slane %v584, %v473
        %v625 = vperm.slane %v587, %v475
        %v626 = vsel %vm477, %v625, %v624
        %v627 = vperm.slane %v590, %v473
        %v628 = vperm.slane %v593, %v475
        %v629 = vsel %vm477, %v628, %v627
        %v630 = vperm.slane %v596, %v473
        %v631 = vperm.slane %v599, %v475
        %v632 = vsel %vm477, %v631, %v630
        %v633 = vperm.slane %v602, %v473
        %v634 = vperm.slane %v605, %v475
        %v635 = vsel %vm477, %v634, %v633
        %v636 = vperm.slane %v608, %v473
        %v637 = vperm.slane %v611, %v475
        %v638 = vsel %vm477, %v637, %v636
        %v639 = vperm.slane %v614, %v473
        %v640 = vperm.slane %v617, %v475
        %v641 = vsel %vm477, %v640, %v639
        %v642 = vsel %vm500, %v623, %v620
        %v643 = vsel %vm502, %v626, %v642
        %v644 = vsel %vm504, %v629, %v643
        %v645 = vsel %vm506, %v632, %v644
        %v646 = vsel %vm508, %v635, %v645
        %v647 = vsel %vm510, %v638, %v646
        %v648 = vsel %vm512, %v641, %v647
        %v650 = vsel %vm515, %v648, 0.0
        %651 = vadd.xlane.f32.xlu0 %v650
        %v652 = vpop.xlane.xlu0 %651
        %s653 = sld [smem:[#allocation6 + $0x1]]
        %v654 = vstv %s653
        %v655 = vadd.f32 %v652, %v654
        %v656 = vmax.f32 %v521, 0.0
        %v657 = vmax.f32 %v655, 0.0
        %v658 = vld [vmem:[%s305] sm:$0xff]
        %v659 = vld [vmem:[%s309] sm:$0xff]
        %v660 = vmul.f32 %v658, %v656
        %v661 = vmul.f32 %v658, %v657
        %663 = vrot.lane.b32.xlu0 %v661, 127
        %v664 = vpop.permute.xlu0 %663
        %v666 = vadd.f32 %v660, %v664
        %v667 = vadd.f32 %v666, %v659
        %669 = vrot.lane.b32.xlu0 %v659, 1
        %v670 = vpop.permute.xlu0 %669
        %v672 = vadd.f32 %v666, %v670
        %674 = vrot.lane.b32.xlu0 %v667, 2
        %v675 = vpop.permute.xlu0 %674
        %vm677 = vcmp.gt.f32.partialorder %v672, %v675
        %v678 = vsel %vm677, 1, 0
        %v679 = vcvt.s32.f32 %v678
        %681 = vset.pattern.permute.xlu0 2
        %682 = vperm.xlu0 %681, %v679
        %v683 = vpop.permute.xlu0 %682
        %685 = vst [vmem:[%s300] sm:$0xff] %v683
        %s686 = sand.u32 %s165, 1
        %s687 = scalar_lea.sflag [#allocation4], %s686
        %s688 = sand.u32 %s165, 1
        %s689 = smul.addr %s688, 8
        %s690 = scalar_lea.vmem [#allocation7], %s689
        // Predicated region
        $region49: #{tpu_custom_call.1} parent=39 // pred_check
          %p691 = pneg %p175
        $region50: #{tpu_custom_call.1} parent=39 // pred_check_branch
          %693 = sbr.rel (%p691) target = $region52
        $region51: #{tpu_custom_call.1} parent=39 // pred_region
          %695 = vsyncadd %s687, 0
          %s696 = smul.addr %s27, 8
          %s697 = scalar_lea.hbm %s5, %s696
          %s699 = sshll.u32 %s690, 4
          %s700 = int_to_ptr.vmem [resolvable:$true] %s699
          %s701 = sshll.u32 %s697, 4
          %s702 = int_to_ptr.hbm [resolvable:$true] %s701
          %704 = dma.vmem_to_hbm [thread:$0]  %s700, 128, %s702, %s687
        $region52: #{tpu_custom_call.1} parent=39 // pred_fallthru
          _
      $region40: #{tpu_custom_call.1} parent=5 // pred_fallthru
        _
      %p705 = scmp.le.s32.totalorder 2, %s18
      // Predicated region
      $region53: #{tpu_custom_call.1} parent=5 // pred_check
        %p706 = pneg %p705
      $region54: #{tpu_custom_call.1} parent=5 // pred_check_branch
        %708 = sbr.rel (%p706) target = $region56
      $region55: #{tpu_custom_call.1} parent=5 // pred_region
        %s709 = ssub.s32 %s18, 2
        // Predicated region
        $region57: #{tpu_custom_call.1} parent=55 // pred_check
          %p710 = pneg %p181
        $region58: #{tpu_custom_call.1} parent=55 // pred_check_branch
          %712 = sbr.rel (%p710) target = $region60
        $region59: #{tpu_custom_call.1} parent=55 // pred_region
          %s713 = sand.u32 %s166, 1
          %s714 = scalar_lea.sflag [#allocation4], %s713
          %s715 = sand.u32 %s166, 1
          %s716 = smul.addr %s715, 8
          %s717 = scalar_lea.vmem [#allocation7], %s716
          %719 = dma.done %s714, 128
        $region60: #{tpu_custom_call.1} parent=55 // pred_fallthru
          _
      $region56: #{tpu_custom_call.1} parent=5 // pred_fallthru
        _
    $region6: #{tpu_custom_call.1} parent=1 // loop_footer
      %s22 = sadd.s32 1, %s18
    $region7: #{tpu_custom_call.1} parent=1 // loop_footer_branch
      %17 = sbr.rel target = $region3
    $region8: #{tpu_custom_call.1} parent=1 // loop_exit
      _
    %720 = vsyncpa [#allocation3], 1
    %s721 = scalar_lea.sflag [#allocation3], 1
    %722 = vsyncpa %s721, 1
    %723 = vsyncpa [#allocation4], 1
    %s724 = scalar_lea.sflag [#allocation4], 1
    %725 = vsyncpa %s724, 1
    %726 = vsyncpa [#allocation5], 1
    %s727 = scalar_lea.sflag [#allocation5], 1
    %728 = vsyncpa %s727, 1

</llo_original>
